<compile_context>
chip_gen: v5e
topology: v5e:2x2
jax: 0.10.0
libtpu: 0.0.40
codegen_flags: <defaults>
</compile_context>

<pallas_src>
import numpy as np
import jax
import jax.numpy as jnp
from jax.experimental import pallas as pl
from jax.experimental.pallas import tpu as pltpu

# ---------------- problem sizes ----------------
B = 512          # batch (many diffusion samples per call)
D = 16           # data_size (flat sequence dim of y)
C = 4            # conditioning dim
H = 32           # hidden width of the stand-in noise-prediction MLP
T = 100          # diffusion steps
UNCOND_PROB = 0.1

LANE = 128       # lane-dense feature width for all packed slabs

# packed-input column layout (K axis of X / G / W1p rows)
#   [0:D)        y        *  a
#   [D:2D)       noise    *  b
#   [2D:2D+C)    cond     *  cond_mask
#   COL_T        1        *  ts/T
#   COL_ONE      1        *  1        (bias channel)
COL_T = 2 * D + C            # 36
COL_ONE = COL_T + 1          # 37
N_REAL_COLS = COL_ONE + 1    # 38


def _pick_num_tiles():
    """One grid step per TensorCore: 2 on v7x (2 TCs/chip), else 1."""
    try:
        kind = jax.devices()[0].device_kind.lower()
    except Exception:
        return 1
    return 2 if "7" in kind else 1


NUM_TILES = _pick_num_tiles()


# --------------------------------- Pallas kernel ------------------------------------
def ddpm_forward_kernel(x_ref, g_ref, w1_ref, w2_ref, psum_ref):
    # (1)+(2) noising & classifier-free masking as a single VPU multiply:
    #   a = [a*y | b*noise | mask*cond | ts/T | 1 | 0...]
    # multiply in f32 (v5e has no bf16 VALU), cast the product just before the dot.
    a = (x_ref[...].astype(jnp.float32) * g_ref[...].astype(jnp.float32)
         ).astype(jnp.bfloat16)                                          # (TB, 128)

    # (3) stand-in noise-prediction MLP, fused into one MXU matmul per layer.
    #   W1p rows are laid out so that  a @ W1p == concat([y_t, t/T, cond*mask, 1]) @ [W1;b1]
    #   (the y and noise column groups both hit W1y, which is exactly y_t @ W1y).
    h = jnp.dot(a, w1_ref[...], preferred_element_type=jnp.float32)      # (TB, 128) f32
    h = jnp.maximum(h, 0.0).astype(jnp.bfloat16)                         # ReLU; bias-1 col H stays 1
    est_full = jnp.dot(h, w2_ref[...], preferred_element_type=jnp.float32)   # (TB, 128) f32
    est = est_full[:, :D]                                                # real est lives in cols [0:D)

    # (4) MSE partial sums on the 16 real lanes only; re-read the noise window
    #     from x_ref (short live range, spare vld slot -> no spills at TB=512).
    noise = x_ref[:, D:2 * D].astype(jnp.float32)                        # (TB, D)
    diff = noise - est
    sq = diff * diff                                                     # (TB, D)

    # pairwise tree reduction over row groups -> (8, D); mean finished in JAX.
    rows = sq.shape[0]
    acc = sq
    while rows > 8:
        half = rows // 2
        acc = acc[:half] + acc[half:rows]
        rows = half
    psum_ref[0] = acc                                                    # (8, D)


# --------------------------------- packing helpers ----------------------------------
def pack_weights(raw_params):
    """Pack the stand-in MLP weights into two 128x128 bf16 blobs (biases folded)."""
    w1y, w1t, w1c, b1, w2, b2 = raw_params
    w1p = jnp.zeros((LANE, LANE), jnp.float32)
    w1p = w1p.at[0:D, 0:H].set(w1y)               # y  (scaled by a)    -> W1y
    w1p = w1p.at[D:2 * D, 0:H].set(w1y)           # noise (scaled by b) -> W1y  (== y_t @ W1y)
    w1p = w1p.at[2 * D:2 * D + C, 0:H].set(w1c)   # cond * mask         -> W1c
    w1p = w1p.at[COL_T, 0:H].set(w1t[0])          # ts / T              -> W1t
    w1p = w1p.at[COL_ONE, 0:H].set(b1[0])         # constant 1          -> b1
    w1p = w1p.at[COL_ONE, H].set(1.0)             # route constant 1 into hidden col H (for b2)

    w2p = jnp.zeros((LANE, LANE), jnp.float32)
    w2p = w2p.at[0:H, 0:D].set(w2)                # hidden -> est, placed at cols [0:D)
    w2p = w2p.at[H, 0:D].set(b2[0])               # bias channel -> b2
    return w1p.astype(jnp.bfloat16), w2p.astype(jnp.bfloat16)


def pack_inputs(y, cond, noise, a, b, t_norm, cond_mask):
    """Build the lane-dense bf16 data slab X and per-row gain slab G."""
    bn = y.shape[0]
    ones = jnp.ones((bn, 1), jnp.float32)
    pad = jnp.zeros((bn, LANE - N_REAL_COLS), jnp.float32)
    x = jnp.concatenate([y, noise, cond, ones, ones, pad], axis=1).astype(jnp.bfloat16)
    g = jnp.concatenate([jnp.broadcast_to(a, (bn, D)),
                         jnp.broadcast_to(b, (bn, D)),
                         jnp.broadcast_to(cond_mask, (bn, C)),
                         t_norm, ones, pad], axis=1).astype(jnp.bfloat16)
    return x, g


# ------------------------------------ wrappers ---------------------------------------
def draw_forward_randoms(key, batch, data_dim):
    """ts ~ randint(0,T,(1,B)); noise ~ N(0,1); cond_mask ~ Bernoulli(1-uncond_prob)."""
    k_ts, k_noise, k_mask = jax.random.split(key, 3)
    ts = jax.random.randint(k_ts, (1, batch), 0, T)
    noise = jax.random.normal(k_noise, (batch, data_dim), dtype=jnp.float32)
    cond_mask = jax.random.bernoulli(
        k_mask, 1.0 - UNCOND_PROB, (batch, 1)).astype(jnp.float32)
    return ts[0], noise, cond_mask


@jax.jit
def ddpm_loss_pallas(packed_params, schedule, y, cond, ts_flat, noise, cond_mask):
    """Fused-kernel path: returns scalar MSE loss (== F.mse_loss(noise, est))."""
    w1p, w2p = packed_params
    sqrt_acp, sqrt_om_acp = schedule
    bn = y.shape[0]
    nb = NUM_TILES
    assert bn % nb == 0 and (bn // nb) % 8 == 0, "batch must tile evenly"
    tb = bn // nb

    a = sqrt_acp[ts_flat][:, None].astype(jnp.float32)        # (B, 1)
    b = sqrt_om_acp[ts_flat][:, None].astype(jnp.float32)     # (B, 1)
    t_norm = (ts_flat.astype(jnp.float32) / T)[:, None]       # (B, 1)

    x, g = pack_inputs(y, cond, noise, a, b, t_norm, cond_mask)

    flops = 2 * 2 * bn * LANE * LANE                          # two 128-deep matmuls per row
    bytes_accessed = (x.size + g.size + w1p.size + w2p.size) * 2 + nb * 8 * D * 4

    partials = pl.pallas_call(
        ddpm_forward_kernel,
        out_shape=jax.ShapeDtypeStruct((nb, 8, D), jnp.float32),
        grid=(nb,),
        in_specs=[
            pl.BlockSpec((tb, LANE), lambda i: (i, 0)),        # X   (per-tile, bf16)
            pl.BlockSpec((tb, LANE), lambda i: (i, 0)),        # G   (per-tile, bf16)
            pl.BlockSpec((LANE, LANE), lambda i: (0, 0)),      # W1p (resident, bf16)
            pl.BlockSpec((LANE, LANE), lambda i: (0, 0)),      # W2p (resident, bf16)
        ],
        out_specs=pl.BlockSpec((1, 8, D), lambda i: (i, 0, 0)),
        compiler_params=pltpu.CompilerParams(
            dimension_semantics=("parallel",)),
        cost_estimate=pl.CostEstimate(
            flops=int(flops), transcendentals=0, bytes_accessed=int(bytes_accessed)),
    )(x, g, w1p, w2p)

    # finish the mean over the B*D real elements
    return jnp.sum(partials) / (bn * D)


def ddpm_forward(key, y, cond, packed_params, schedule):
    """JAX equivalent of DDPM.forward(y, cond) -> scalar MSE loss."""
    ts_flat, noise, cond_mask = draw_forward_randoms(key, y.shape[0], y.shape[1])
    return ddpm_loss_pallas(packed_params, schedule, y, cond, ts_flat, noise, cond_mask)


def ddpm_loss_ref(raw_params, schedule, y, cond, ts_flat, noise, cond_mask):
    """Pure-JAX f32 reference of the same forward pass (for a correctness check)."""
    w1y, w1t, w1c, b1, w2, b2 = raw_params
    sqrt_acp, sqrt_om_acp = schedule
    a = sqrt_acp[ts_flat][:, None]
    b = sqrt_om_acp[ts_flat][:, None]
    y_t = a * y + b * noise
    t_norm = (ts_flat.astype(jnp.float32) / T)[:, None]
    cond_m = cond * cond_mask
    hp = jax.lax.Precision.HIGHEST
    h = jnp.maximum(jnp.dot(y_t, w1y, precision=hp)
                    + jnp.dot(t_norm, w1t, precision=hp)
                    + jnp.dot(cond_m, w1c, precision=hp) + b1, 0.0)
    est = jnp.dot(h, w2, precision=hp) + b2
    return jnp.mean((noise - est) ** 2)


# ---------------------------------- setup / main ------------------------------------
def make_schedule():
    betas = np.linspace(1e-4, 0.02, T).astype(np.float64)
    alphas = 1.0 - betas
    alphas_cumprod = np.cumprod(alphas)
    sqrt_acp = jnp.asarray(np.sqrt(alphas_cumprod), dtype=jnp.float32)
    sqrt_om_acp = jnp.asarray(np.sqrt(1.0 - alphas_cumprod), dtype=jnp.float32)
    return sqrt_acp, sqrt_om_acp


def make_params(key):
    k1, k2, k3, k4 = jax.random.split(key, 4)
    in_dim = D + 1 + C
    scale1 = 1.0 / np.sqrt(in_dim)
    scale2 = 1.0 / np.sqrt(H)
    w1y = jax.random.normal(k1, (D, H), dtype=jnp.float32) * scale1
    w1t = jax.random.normal(k2, (1, H), dtype=jnp.float32) * scale1
    w1c = jax.random.normal(k3, (C, H), dtype=jnp.float32) * scale1
    b1 = jnp.zeros((1, H), dtype=jnp.float32)
    w2 = jax.random.normal(k4, (H, D), dtype=jnp.float32) * scale2
    b2 = jnp.zeros((1, D), dtype=jnp.float32)
    return w1y, w1t, w1c, b1, w2, b2


if __name__ == "__main__":
    root = jax.random.PRNGKey(0)
    k_data, k_cond, k_params, k_fwd = jax.random.split(root, 4)

    y = jax.random.normal(k_data, (B, D), dtype=jnp.float32)
    cond = jax.random.normal(k_cond, (B, C), dtype=jnp.float32)
    raw_params = make_params(k_params)
    packed_params = pack_weights(raw_params)
    schedule = make_schedule()

    loss = ddpm_forward(k_fwd, y, cond, packed_params, schedule)
    loss = jax.block_until_ready(loss)
    assert loss.shape == () and bool(jnp.isfinite(loss))

    # correctness check against a pure-JAX f32 reference using the identical randoms
    # (tolerance loosened vs the f32 kernel because operands are now bf16)
    ts_flat, noise, cond_mask = draw_forward_randoms(k_fwd, B, D)
    ref = ddpm_loss_ref(raw_params, schedule, y, cond, ts_flat, noise, cond_mask)
    ref = jax.block_until_ready(ref)
    tol = 3e-2 * max(1.0, abs(float(ref)))
    assert abs(float(loss) - float(ref)) < tol, (float(loss), float(ref))

    print("KERNEL_OK")
</pallas_src>

<mosaic_0001>
module attributes {stable_mosaic.version = 11 : i64} {
  func.func @ddpm_forward_kernel(%arg0: i32, %arg1: memref<512x128xbf16, #tpu.memory_space<vmem>>, %arg2: memref<512x128xbf16, #tpu.memory_space<vmem>>, %arg3: memref<128x128xbf16, #tpu.memory_space<vmem>>, %arg4: memref<128x128xbf16, #tpu.memory_space<vmem>>, %arg5: memref<1x8x16xf32, #tpu.memory_space<vmem>>) attributes {dimension_semantics = [#tpu.dimension_semantics<parallel>], iteration_bounds = array<i64: 1>, scalar_prefetch = 0 : i64, scratch_operands = 0 : i64, tpu.core_type = #tpu.core_type<tc>, window_params = [{transform_indices = @transform_0, window_bounds = array<i64: 512, 128>}, {transform_indices = @transform_1, window_bounds = array<i64: 512, 128>}, {pipeline_mode = #tpu.pipeline_mode<synchronous>, transform_indices = @transform_2, window_bounds = array<i64: 128, 128>}, {pipeline_mode = #tpu.pipeline_mode<synchronous>, transform_indices = @transform_3, window_bounds = array<i64: 128, 128>}, {transform_indices = @transform_4, window_bounds = array<i64: 1, 8, 16>}]} {
    %c0 = arith.constant 0 : index
    %c0_0 = arith.constant 0 : index
    %0 = vector.load %arg1[%c0, %c0_0] : memref<512x128xbf16, #tpu.memory_space<vmem>>, vector<512x128xbf16>
    %1 = arith.extf %0 : vector<512x128xbf16> to vector<512x128xf32>
    %c0_1 = arith.constant 0 : index
    %c0_2 = arith.constant 0 : index
    %2 = vector.load %arg2[%c0_1, %c0_2] : memref<512x128xbf16, #tpu.memory_space<vmem>>, vector<512x128xbf16>
    %3 = arith.extf %2 : vector<512x128xbf16> to vector<512x128xf32>
    %4 = arith.mulf %1, %3 : vector<512x128xf32>
    %5 = arith.truncf %4 : vector<512x128xf32> to vector<512x128xbf16>
    %c0_3 = arith.constant 0 : index
    %c0_4 = arith.constant 0 : index
    %6 = vector.load %arg3[%c0_3, %c0_4] : memref<128x128xbf16, #tpu.memory_space<vmem>>, vector<128x128xbf16>
    %cst = arith.constant dense<0.000000e+00> : vector<512x128xf32>
    %7 = tpu.matmul %5, %6, %cst {dimension_numbers = #tpu.dot_dimension_numbers<[1], [0], [0], [1], [0, 0, 1, 1], [], []>} : vector<512x128xbf16>, vector<128x128xbf16>, vector<512x128xf32> -> vector<512x128xf32>
    %cst_5 = arith.constant 0.000000e+00 : f32
    %8 = vector.broadcast %cst_5 : f32 to vector<512x128xf32>
    %9 = arith.maximumf %7, %8 : vector<512x128xf32>
    %10 = arith.truncf %9 : vector<512x128xf32> to vector<512x128xbf16>
    %c0_6 = arith.constant 0 : index
    %c0_7 = arith.constant 0 : index
    %11 = vector.load %arg4[%c0_6, %c0_7] : memref<128x128xbf16, #tpu.memory_space<vmem>>, vector<128x128xbf16>
    %cst_8 = arith.constant dense<0.000000e+00> : vector<512x128xf32>
    %12 = tpu.matmul %10, %11, %cst_8 {dimension_numbers = #tpu.dot_dimension_numbers<[1], [0], [0], [1], [0, 0, 1, 1], [], []>} : vector<512x128xbf16>, vector<128x128xbf16>, vector<512x128xf32> -> vector<512x128xf32>
    %13 = vector.extract_strided_slice %12 {offsets = [0, 0], sizes = [512, 16], strides = [1, 1]} : vector<512x128xf32> to vector<512x16xf32>
    %c0_9 = arith.constant 0 : index
    %c16 = arith.constant 16 : index
    %14 = vector.load %arg1[%c0_9, %c16] : memref<512x128xbf16, #tpu.memory_space<vmem>>, vector<512x16xbf16>
    %15 = arith.extf %14 : vector<512x16xbf16> to vector<512x16xf32>
    %16 = arith.subf %15, %13 : vector<512x16xf32>
    %17 = arith.mulf %16, %16 : vector<512x16xf32>
    %18 = vector.extract_strided_slice %17 {offsets = [0, 0], sizes = [256, 16], strides = [1, 1]} : vector<512x16xf32> to vector<256x16xf32>
    %19 = vector.extract_strided_slice %17 {offsets = [256, 0], sizes = [256, 16], strides = [1, 1]} : vector<512x16xf32> to vector<256x16xf32>
    %20 = arith.addf %18, %19 : vector<256x16xf32>
    %21 = vector.extract_strided_slice %20 {offsets = [0, 0], sizes = [128, 16], strides = [1, 1]} : vector<256x16xf32> to vector<128x16xf32>
    %22 = vector.extract_strided_slice %20 {offsets = [128, 0], sizes = [128, 16], strides = [1, 1]} : vector<256x16xf32> to vector<128x16xf32>
    %23 = arith.addf %21, %22 : vector<128x16xf32>
    %24 = vector.extract_strided_slice %23 {offsets = [0, 0], sizes = [64, 16], strides = [1, 1]} : vector<128x16xf32> to vector<64x16xf32>
    %25 = vector.extract_strided_slice %23 {offsets = [64, 0], sizes = [64, 16], strides = [1, 1]} : vector<128x16xf32> to vector<64x16xf32>
    %26 = arith.addf %24, %25 : vector<64x16xf32>
    %27 = vector.extract_strided_slice %26 {offsets = [0, 0], sizes = [32, 16], strides = [1, 1]} : vector<64x16xf32> to vector<32x16xf32>
    %28 = vector.extract_strided_slice %26 {offsets = [32, 0], sizes = [32, 16], strides = [1, 1]} : vector<64x16xf32> to vector<32x16xf32>
    %29 = arith.addf %27, %28 : vector<32x16xf32>
    %30 = vector.extract_strided_slice %29 {offsets = [0, 0], sizes = [16, 16], strides = [1, 1]} : vector<32x16xf32> to vector<16x16xf32>
    %31 = vector.extract_strided_slice %29 {offsets = [16, 0], sizes = [16, 16], strides = [1, 1]} : vector<32x16xf32> to vector<16x16xf32>
    %32 = arith.addf %30, %31 : vector<16x16xf32>
    %33 = vector.extract_strided_slice %32 {offsets = [0, 0], sizes = [8, 16], strides = [1, 1]} : vector<16x16xf32> to vector<8x16xf32>
    %34 = vector.extract_strided_slice %32 {offsets = [8, 0], sizes = [8, 16], strides = [1, 1]} : vector<16x16xf32> to vector<8x16xf32>
    %35 = arith.addf %33, %34 : vector<8x16xf32>
    %c0_10 = arith.constant 0 : index
    %c0_11 = arith.constant 0 : index
    %c0_12 = arith.constant 0 : index
    %36 = vector.load %arg5[%c0_10, %c0_11, %c0_12] : memref<1x8x16xf32, #tpu.memory_space<vmem>>, vector<1x8x16xf32>
    %37 = vector.shape_cast %36 : vector<1x8x16xf32> to vector<8x16xf32>
    %38 = vector.shape_cast %35 : vector<8x16xf32> to vector<1x8x16xf32>
    tpu.vector_store %arg5[%c0_10, %c0_11, %c0_12], %38 {strides = array<i32>} : memref<1x8x16xf32, #tpu.memory_space<vmem>>, vector<1x8x16xf32>,
    return
  }
  func.func @transform_0(%arg0: i32) -> (i32, i32) {
    %c0_i32 = arith.constant 0 : i32
    %c0_i32_0 = arith.constant 0 : i32
    return %arg0, %c0_i32 : i32, i32
  }
  func.func @transform_1(%arg0: i32) -> (i32, i32) {
    %c0_i32 = arith.constant 0 : i32
    %c0_i32_0 = arith.constant 0 : i32
    return %arg0, %c0_i32 : i32, i32
  }
  func.func @transform_2(%arg0: i32) -> (i32, i32) {
    %c0_i32 = arith.constant 0 : i32
    %c0_i32_0 = arith.constant 0 : i32
    %c0_i32_1 = arith.constant 0 : i32
    return %c0_i32, %c0_i32_0 : i32, i32
  }
  func.func @transform_3(%arg0: i32) -> (i32, i32) {
    %c0_i32 = arith.constant 0 : i32
    %c0_i32_0 = arith.constant 0 : i32
    %c0_i32_1 = arith.constant 0 : i32
    return %c0_i32, %c0_i32_0 : i32, i32
  }
  func.func @transform_4(%arg0: i32) -> (i32, i32, i32) {
    %c0_i32 = arith.constant 0 : i32
    %c0_i32_0 = arith.constant 0 : i32
    %c0_i32_1 = arith.constant 0 : i32
    return %arg0, %c0_i32, %c0_i32_0 : i32, i32, i32
  }
}

</mosaic_0001>

<llo_original>
// kernel: ddpm_loss_pallas.1
$region0: #{ddpm_loss_pallas.1}
  #allocation0 [shape = 'u32[]', space=smem, size = 0x4, offset = 0x4, fixed_abs, tag = 'smem constant byte address 0x4 - core index']
  #allocation1 [shape = 'u32[72,128]{1,0:T(1,128)}', space=vmem, size = 0x9000, scoped, tag = 'internal scratch']
  %s0 = inlined_call_operand.vmem [shape: bf16[512,128], index: 0, kind: input, shape index: {}]
  %s1 = inlined_call_operand.vmem [shape: bf16[512,128], index: 1, kind: input, shape index: {}]
  %s2 = inlined_call_operand.vmem [shape: bf16[128,128], index: 2, kind: input, shape index: {}]
  %s3 = inlined_call_operand.vmem [shape: bf16[128,128], index: 3, kind: input, shape index: {}]
  %s4 = inlined_call_operand.vmem [shape: f32[1,8,16], index: 4, kind: output, shape index: {}]
  %s5 = sld [smem:[#allocation0]]
  $region26: #{ddpm_loss_pallas.1} parent=0
    _
  %s7 = ssub.s32 1, %s5
  %s8 = scalar_select 0, %s7, %s5
  // Predicated region
  $region2: #{ddpm_loss_pallas.1} parent=0 // pred_check
    _
  $region3: #{ddpm_loss_pallas.1} parent=0 // pred_check_branch
    %10 = sbr.rel (0) target = $region5
  $region4: #{ddpm_loss_pallas.1} parent=0 // pred_region
    _
  $region5: #{ddpm_loss_pallas.1} parent=0 // pred_fallthru
    _
  // Predicated region
  $region6: #{ddpm_loss_pallas.1} parent=0 // pred_check
    _
  $region7: #{ddpm_loss_pallas.1} parent=0 // pred_check_branch
    %12 = sbr.rel (0) target = $region9
  $region8: #{ddpm_loss_pallas.1} parent=0 // pred_region
    _
  $region9: #{ddpm_loss_pallas.1} parent=0 // pred_fallthru
    _
  // Predicated region
  $region10: #{ddpm_loss_pallas.1} parent=0 // pred_check
    _
  $region11: #{ddpm_loss_pallas.1} parent=0 // pred_check_branch
    %14 = sbr.rel (0) target = $region13
  $region12: #{ddpm_loss_pallas.1} parent=0 // pred_region
    _
  $region13: #{ddpm_loss_pallas.1} parent=0 // pred_fallthru
    _
  // Predicated region
  $region14: #{ddpm_loss_pallas.1} parent=0 // pred_check
    _
  $region15: #{ddpm_loss_pallas.1} parent=0 // pred_check_branch
    %16 = sbr.rel (0) target = $region17
  $region16: #{ddpm_loss_pallas.1} parent=0 // pred_region
    _
  $region17: #{ddpm_loss_pallas.1} parent=0 // pred_fallthru
    _
  %v17 = vld [vmem:[%s0] sm:$0xf]
  %v18 = vld [vmem:[%s0 + $0x4] sm:$0xf]
  %v19 = vld [vmem:[%s0 + $0x8] sm:$0xf]
  %v20 = vld [vmem:[%s0 + $0xc] sm:$0xf]
  %v21 = vld [vmem:[%s0 + $0x10] sm:$0xf]
  %v22 = vld [vmem:[%s0 + $0x14] sm:$0xf]
  %v23 = vld [vmem:[%s0 + $0x18] sm:$0xf]
  %v24 = vld [vmem:[%s0 + $0x1c] sm:$0xf]
  %v25 = vld [vmem:[%s0 + $0x20] sm:$0xf]
  %v26 = vld [vmem:[%s0 + $0x24] sm:$0xf]
  %v27 = vld [vmem:[%s0 + $0x28] sm:$0xf]
  %v28 = vld [vmem:[%s0 + $0x2c] sm:$0xf]
  %v29 = vld [vmem:[%s0 + $0x30] sm:$0xf]
  %v30 = vld [vmem:[%s0 + $0x34] sm:$0xf]
  %v31 = vld [vmem:[%s0 + $0x38] sm:$0xf]
  %v32 = vld [vmem:[%s0 + $0x3c] sm:$0xf]
  %v33 = vld [vmem:[%s0 + $0x40] sm:$0xf]
  %v34 = vld [vmem:[%s0 + $0x44] sm:$0xf]
  %v35 = vld [vmem:[%s0 + $0x48] sm:$0xf]
  %v36 = vld [vmem:[%s0 + $0x4c] sm:$0xf]
  %v37 = vld [vmem:[%s0 + $0x50] sm:$0xf]
  %v38 = vld [vmem:[%s0 + $0x54] sm:$0xf]
  %v39 = vld [vmem:[%s0 + $0x58] sm:$0xf]
  %v40 = vld [vmem:[%s0 + $0x5c] sm:$0xf]
  %v41 = vld [vmem:[%s0 + $0x60] sm:$0xf]
  %v42 = vld [vmem:[%s0 + $0x64] sm:$0xf]
  %v43 = vld [vmem:[%s0 + $0x68] sm:$0xf]
  %v44 = vld [vmem:[%s0 + $0x6c] sm:$0xf]
  %v45 = vld [vmem:[%s0 + $0x70] sm:$0xf]
  %v46 = vld [vmem:[%s0 + $0x74] sm:$0xf]
  %v47 = vld [vmem:[%s0 + $0x78] sm:$0xf]
  %v48 = vld [vmem:[%s0 + $0x7c] sm:$0xf]
  %v49 = vld [vmem:[%s0 + $0x80] sm:$0xf]
  %v50 = vld [vmem:[%s0 + $0x84] sm:$0xf]
  %v51 = vld [vmem:[%s0 + $0x88] sm:$0xf]
  %v52 = vld [vmem:[%s0 + $0x8c] sm:$0xf]
  %v53 = vld [vmem:[%s0 + $0x90] sm:$0xf]
  %v54 = vld [vmem:[%s0 + $0x94] sm:$0xf]
  %v55 = vld [vmem:[%s0 + $0x98] sm:$0xf]
  %v56 = vld [vmem:[%s0 + $0x9c] sm:$0xf]
  %v57 = vld [vmem:[%s0 + $0xa0] sm:$0xf]
  %v58 = vld [vmem:[%s0 + $0xa4] sm:$0xf]
  %v59 = vld [vmem:[%s0 + $0xa8] sm:$0xf]
  %v60 = vld [vmem:[%s0 + $0xac] sm:$0xf]
  %v61 = vld [vmem:[%s0 + $0xb0] sm:$0xf]
  %v62 = vld [vmem:[%s0 + $0xb4] sm:$0xf]
  %v63 = vld [vmem:[%s0 + $0xb8] sm:$0xf]
  %v64 = vld [vmem:[%s0 + $0xbc] sm:$0xf]
  %v65 = vld [vmem:[%s0 + $0xc0] sm:$0xf]
  %v66 = vld [vmem:[%s0 + $0xc4] sm:$0xf]
  %v67 = vld [vmem:[%s0 + $0xc8] sm:$0xf]
  %v68 = vld [vmem:[%s0 + $0xcc] sm:$0xf]
  %v69 = vld [vmem:[%s0 + $0xd0] sm:$0xf]
  %v70 = vld [vmem:[%s0 + $0xd4] sm:$0xf]
  %v71 = vld [vmem:[%s0 + $0xd8] sm:$0xf]
  %v72 = vld [vmem:[%s0 + $0xdc] sm:$0xf]
  %v73 = vld [vmem:[%s0 + $0xe0] sm:$0xf]
  %v74 = vld [vmem:[%s0 + $0xe4] sm:$0xf]
  %v75 = vld [vmem:[%s0 + $0xe8] sm:$0xf]
  %v76 = vld [vmem:[%s0 + $0xec] sm:$0xf]
  %v77 = vld [vmem:[%s0 + $0xf0] sm:$0xf]
  %v78 = vld [vmem:[%s0 + $0xf4] sm:$0xf]
  %v79 = vld [vmem:[%s0 + $0xf8] sm:$0xf]
  %v80 = vld [vmem:[%s0 + $0xfc] sm:$0xf]
  %v81 = vunpack.c.l.bf16 %v17
  %v82 = vunpack.c.l.bf16 %v18
  %v83 = vunpack.c.l.bf16 %v19
  %v84 = vunpack.c.l.bf16 %v20
  %v85 = vunpack.c.l.bf16 %v21
  %v86 = vunpack.c.l.bf16 %v22
  %v87 = vunpack.c.l.bf16 %v23
  %v88 = vunpack.c.l.bf16 %v24
  %v89 = vunpack.c.l.bf16 %v25
  %v90 = vunpack.c.l.bf16 %v26
  %v91 = vunpack.c.l.bf16 %v27
  %v92 = vunpack.c.l.bf16 %v28
  %v93 = vunpack.c.l.bf16 %v29
  %v94 = vunpack.c.l.bf16 %v30
  %v95 = vunpack.c.l.bf16 %v31
  %v96 = vunpack.c.l.bf16 %v32
  %v97 = vunpack.c.l.bf16 %v33
  %v98 = vunpack.c.l.bf16 %v34
  %v99 = vunpack.c.l.bf16 %v35
  %v100 = vunpack.c.l.bf16 %v36
  %v101 = vunpack.c.l.bf16 %v37
  %v102 = vunpack.c.l.bf16 %v38
  %v103 = vunpack.c.l.bf16 %v39
  %v104 = vunpack.c.l.bf16 %v40
  %v105 = vunpack.c.l.bf16 %v41
  %v106 = vunpack.c.l.bf16 %v42
  %v107 = vunpack.c.l.bf16 %v43
  %v108 = vunpack.c.l.bf16 %v44
  %v109 = vunpack.c.l.bf16 %v45
  %v110 = vunpack.c.l.bf16 %v46
  %v111 = vunpack.c.l.bf16 %v47
  %v112 = vunpack.c.l.bf16 %v48
  %v113 = vunpack.c.l.bf16 %v49
  %v114 = vunpack.c.l.bf16 %v50
  %v115 = vunpack.c.l.bf16 %v51
  %v116 = vunpack.c.l.bf16 %v52
  %v117 = vunpack.c.l.bf16 %v53
  %v118 = vunpack.c.l.bf16 %v54
  %v119 = vunpack.c.l.bf16 %v55
  %v120 = vunpack.c.l.bf16 %v56
  %v121 = vunpack.c.l.bf16 %v57
  %v122 = vunpack.c.l.bf16 %v58
  %v123 = vunpack.c.l.bf16 %v59
  %v124 = vunpack.c.l.bf16 %v60
  %v125 = vunpack.c.l.bf16 %v61
  %v126 = vunpack.c.l.bf16 %v62
  %v127 = vunpack.c.l.bf16 %v63
  %v128 = vunpack.c.l.bf16 %v64
  %v129 = vunpack.c.l.bf16 %v65
  %v130 = vunpack.c.l.bf16 %v66
  %v131 = vunpack.c.l.bf16 %v67
  %v132 = vunpack.c.l.bf16 %v68
  %v133 = vunpack.c.l.bf16 %v69
  %v134 = vunpack.c.l.bf16 %v70
  %v135 = vunpack.c.l.bf16 %v71
  %v136 = vunpack.c.l.bf16 %v72
  %v137 = vunpack.c.l.bf16 %v73
  %v138 = vunpack.c.l.bf16 %v74
  %v139 = vunpack.c.l.bf16 %v75
  %v140 = vunpack.c.l.bf16 %v76
  %v141 = vunpack.c.l.bf16 %v77
  %v142 = vunpack.c.l.bf16 %v78
  %v143 = vunpack.c.l.bf16 %v79
  %v144 = vunpack.c.l.bf16 %v80
  %v145 = vld [vmem:[%s1] sm:$0xf]
  %v146 = vld [vmem:[%s1 + $0x4] sm:$0xf]
  %v147 = vld [vmem:[%s1 + $0x8] sm:$0xf]
  %v148 = vld [vmem:[%s1 + $0xc] sm:$0xf]
  %v149 = vld [vmem:[%s1 + $0x10] sm:$0xf]
  %v150 = vld [vmem:[%s1 + $0x14] sm:$0xf]
  %v151 = vld [vmem:[%s1 + $0x18] sm:$0xf]
  %v152 = vld [vmem:[%s1 + $0x1c] sm:$0xf]
  %v153 = vld [vmem:[%s1 + $0x20] sm:$0xf]
  %v154 = vld [vmem:[%s1 + $0x24] sm:$0xf]
  %v155 = vld [vmem:[%s1 + $0x28] sm:$0xf]
  %v156 = vld [vmem:[%s1 + $0x2c] sm:$0xf]
  %v157 = vld [vmem:[%s1 + $0x30] sm:$0xf]
  %v158 = vld [vmem:[%s1 + $0x34] sm:$0xf]
  %v159 = vld [vmem:[%s1 + $0x38] sm:$0xf]
  %v160 = vld [vmem:[%s1 + $0x3c] sm:$0xf]
  %v161 = vld [vmem:[%s1 + $0x40] sm:$0xf]
  %v162 = vld [vmem:[%s1 + $0x44] sm:$0xf]
  %v163 = vld [vmem:[%s1 + $0x48] sm:$0xf]
  %v164 = vld [vmem:[%s1 + $0x4c] sm:$0xf]
  %v165 = vld [vmem:[%s1 + $0x50] sm:$0xf]
  %v166 = vld [vmem:[%s1 + $0x54] sm:$0xf]
  %v167 = vld [vmem:[%s1 + $0x58] sm:$0xf]
  %v168 = vld [vmem:[%s1 + $0x5c] sm:$0xf]
  %v169 = vld [vmem:[%s1 + $0x60] sm:$0xf]
  %v170 = vld [vmem:[%s1 + $0x64] sm:$0xf]
  %v171 = vld [vmem:[%s1 + $0x68] sm:$0xf]
  %v172 = vld [vmem:[%s1 + $0x6c] sm:$0xf]
  %v173 = vld [vmem:[%s1 + $0x70] sm:$0xf]
  %v174 = vld [vmem:[%s1 + $0x74] sm:$0xf]
  %v175 = vld [vmem:[%s1 + $0x78] sm:$0xf]
  %v176 = vld [vmem:[%s1 + $0x7c] sm:$0xf]
  %v177 = vld [vmem:[%s1 + $0x80] sm:$0xf]
  %v178 = vld [vmem:[%s1 + $0x84] sm:$0xf]
  %v179 = vld [vmem:[%s1 + $0x88] sm:$0xf]
  %v180 = vld [vmem:[%s1 + $0x8c] sm:$0xf]
  %v181 = vld [vmem:[%s1 + $0x90] sm:$0xf]
  %v182 = vld [vmem:[%s1 + $0x94] sm:$0xf]
  %v183 = vld [vmem:[%s1 + $0x98] sm:$0xf]
  %v184 = vld [vmem:[%s1 + $0x9c] sm:$0xf]
  %v185 = vld [vmem:[%s1 + $0xa0] sm:$0xf]
  %v186 = vld [vmem:[%s1 + $0xa4] sm:$0xf]
  %v187 = vld [vmem:[%s1 + $0xa8] sm:$0xf]
  %v188 = vld [vmem:[%s1 + $0xac] sm:$0xf]
  %v189 = vld [vmem:[%s1 + $0xb0] sm:$0xf]
  %v190 = vld [vmem:[%s1 + $0xb4] sm:$0xf]
  %v191 = vld [vmem:[%s1 + $0xb8] sm:$0xf]
  %v192 = vld [vmem:[%s1 + $0xbc] sm:$0xf]
  %v193 = vld [vmem:[%s1 + $0xc0] sm:$0xf]
  %v194 = vld [vmem:[%s1 + $0xc4] sm:$0xf]
  %v195 = vld [vmem:[%s1 + $0xc8] sm:$0xf]
  %v196 = vld [vmem:[%s1 + $0xcc] sm:$0xf]
  %v197 = vld [vmem:[%s1 + $0xd0] sm:$0xf]
  %v198 = vld [vmem:[%s1 + $0xd4] sm:$0xf]
  %v199 = vld [vmem:[%s1 + $0xd8] sm:$0xf]
  %v200 = vld [vmem:[%s1 + $0xdc] sm:$0xf]
  %v201 = vld [vmem:[%s1 + $0xe0] sm:$0xf]
  %v202 = vld [vmem:[%s1 + $0xe4] sm:$0xf]
  %v203 = vld [vmem:[%s1 + $0xe8] sm:$0xf]
  %v204 = vld [vmem:[%s1 + $0xec] sm:$0xf]
  %v205 = vld [vmem:[%s1 + $0xf0] sm:$0xf]
  %v206 = vld [vmem:[%s1 + $0xf4] sm:$0xf]
  %v207 = vld [vmem:[%s1 + $0xf8] sm:$0xf]
  %v208 = vld [vmem:[%s1 + $0xfc] sm:$0xf]
  %v209 = vunpack.c.l.bf16 %v145
  %v210 = vunpack.c.l.bf16 %v146
  %v211 = vunpack.c.l.bf16 %v147
  %v212 = vunpack.c.l.bf16 %v148
  %v213 = vunpack.c.l.bf16 %v149
  %v214 = vunpack.c.l.bf16 %v150
  %v215 = vunpack.c.l.bf16 %v151
  %v216 = vunpack.c.l.bf16 %v152
  %v217 = vunpack.c.l.bf16 %v153
  %v218 = vunpack.c.l.bf16 %v154
  %v219 = vunpack.c.l.bf16 %v155
  %v220 = vunpack.c.l.bf16 %v156
  %v221 = vunpack.c.l.bf16 %v157
  %v222 = vunpack.c.l.bf16 %v158
  %v223 = vunpack.c.l.bf16 %v159
  %v224 = vunpack.c.l.bf16 %v160
  %v225 = vunpack.c.l.bf16 %v161
  %v226 = vunpack.c.l.bf16 %v162
  %v227 = vunpack.c.l.bf16 %v163
  %v228 = vunpack.c.l.bf16 %v164
  %v229 = vunpack.c.l.bf16 %v165
  %v230 = vunpack.c.l.bf16 %v166
  %v231 = vunpack.c.l.bf16 %v167
  %v232 = vunpack.c.l.bf16 %v168
  %v233 = vunpack.c.l.bf16 %v169
  %v234 = vunpack.c.l.bf16 %v170
  %v235 = vunpack.c.l.bf16 %v171
  %v236 = vunpack.c.l.bf16 %v172
  %v237 = vunpack.c.l.bf16 %v173
  %v238 = vunpack.c.l.bf16 %v174
  %v239 = vunpack.c.l.bf16 %v175
  %v240 = vunpack.c.l.bf16 %v176
  %v241 = vunpack.c.l.bf16 %v177
  %v242 = vunpack.c.l.bf16 %v178
  %v243 = vunpack.c.l.bf16 %v179
  %v244 = vunpack.c.l.bf16 %v180
  %v245 = vunpack.c.l.bf16 %v181
  %v246 = vunpack.c.l.bf16 %v182
  %v247 = vunpack.c.l.bf16 %v183
  %v248 = vunpack.c.l.bf16 %v184
  %v249 = vunpack.c.l.bf16 %v185
  %v250 = vunpack.c.l.bf16 %v186
  %v251 = vunpack.c.l.bf16 %v187
  %v252 = vunpack.c.l.bf16 %v188
  %v253 = vunpack.c.l.bf16 %v189
  %v254 = vunpack.c.l.bf16 %v190
  %v255 = vunpack.c.l.bf16 %v191
  %v256 = vunpack.c.l.bf16 %v192
  %v257 = vunpack.c.l.bf16 %v193
  %v258 = vunpack.c.l.bf16 %v194
  %v259 = vunpack.c.l.bf16 %v195
  %v260 = vunpack.c.l.bf16 %v196
  %v261 = vunpack.c.l.bf16 %v197
  %v262 = vunpack.c.l.bf16 %v198
  %v263 = vunpack.c.l.bf16 %v199
  %v264 = vunpack.c.l.bf16 %v200
  %v265 = vunpack.c.l.bf16 %v201
  %v266 = vunpack.c.l.bf16 %v202
  %v267 = vunpack.c.l.bf16 %v203
  %v268 = vunpack.c.l.bf16 %v204
  %v269 = vunpack.c.l.bf16 %v205
  %v270 = vunpack.c.l.bf16 %v206
  %v271 = vunpack.c.l.bf16 %v207
  %v272 = vunpack.c.l.bf16 %v208
  %v273 = vmul.f32 %v81, %v209
  %v274 = vmul.f32 %v82, %v210
  %v275 = vmul.f32 %v83, %v211
  %v276 = vmul.f32 %v84, %v212
  %v277 = vmul.f32 %v85, %v213
  %v278 = vmul.f32 %v86, %v214
  %v279 = vmul.f32 %v87, %v215
  %v280 = vmul.f32 %v88, %v216
  %v281 = vmul.f32 %v89, %v217
  %v282 = vmul.f32 %v90, %v218
  %v283 = vmul.f32 %v91, %v219
  %v284 = vmul.f32 %v92, %v220
  %v285 = vmul.f32 %v93, %v221
  %v286 = vmul.f32 %v94, %v222
  %v287 = vmul.f32 %v95, %v223
  %v288 = vmul.f32 %v96, %v224
  %v289 = vmul.f32 %v97, %v225
  %v290 = vmul.f32 %v98, %v226
  %v291 = vmul.f32 %v99, %v227
  %v292 = vmul.f32 %v100, %v228
  %v293 = vmul.f32 %v101, %v229
  %v294 = vmul.f32 %v102, %v230
  %v295 = vmul.f32 %v103, %v231
  %v296 = vmul.f32 %v104, %v232
  %v297 = vmul.f32 %v105, %v233
  %v298 = vmul.f32 %v106, %v234
  %v299 = vmul.f32 %v107, %v235
  %v300 = vmul.f32 %v108, %v236
  %v301 = vmul.f32 %v109, %v237
  %v302 = vmul.f32 %v110, %v238
  %v303 = vmul.f32 %v111, %v239
  %v304 = vmul.f32 %v112, %v240
  %v305 = vmul.f32 %v113, %v241
  %v306 = vmul.f32 %v114, %v242
  %v307 = vmul.f32 %v115, %v243
  %v308 = vmul.f32 %v116, %v244
  %v309 = vmul.f32 %v117, %v245
  %v310 = vmul.f32 %v118, %v246
  %v311 = vmul.f32 %v119, %v247
  %v312 = vmul.f32 %v120, %v248
  %v313 = vmul.f32 %v121, %v249
  %v314 = vmul.f32 %v122, %v250
  %v315 = vmul.f32 %v123, %v251
  %v316 = vmul.f32 %v124, %v252
  %v317 = vmul.f32 %v125, %v253
  %v318 = vmul.f32 %v126, %v254
  %v319 = vmul.f32 %v127, %v255
  %v320 = vmul.f32 %v128, %v256
  %v321 = vmul.f32 %v129, %v257
  %v322 = vmul.f32 %v130, %v258
  %v323 = vmul.f32 %v131, %v259
  %v324 = vmul.f32 %v132, %v260
  %v325 = vmul.f32 %v133, %v261
  %v326 = vmul.f32 %v134, %v262
  %v327 = vmul.f32 %v135, %v263
  %v328 = vmul.f32 %v136, %v264
  %v329 = vmul.f32 %v137, %v265
  %v330 = vmul.f32 %v138, %v266
  %v331 = vmul.f32 %v139, %v267
  %v332 = vmul.f32 %v140, %v268
  %v333 = vmul.f32 %v141, %v269
  %v334 = vmul.f32 %v142, %v270
  %v335 = vmul.f32 %v143, %v271
  %v336 = vmul.f32 %v144, %v272
  %v337 = vpack.c.bf16 %v274, %v273
  %v338 = vpack.c.bf16 %v276, %v275
  %v339 = vpack.c.bf16 %v278, %v277
  %v340 = vpack.c.bf16 %v280, %v279
  %v341 = vpack.c.bf16 %v282, %v281
  %v342 = vpack.c.bf16 %v284, %v283
  %v343 = vpack.c.bf16 %v286, %v285
  %v344 = vpack.c.bf16 %v288, %v287
  %v345 = vpack.c.bf16 %v290, %v289
  %v346 = vpack.c.bf16 %v292, %v291
  %v347 = vpack.c.bf16 %v294, %v293
  %v348 = vpack.c.bf16 %v296, %v295
  %v349 = vpack.c.bf16 %v298, %v297
  %v350 = vpack.c.bf16 %v300, %v299
  %v351 = vpack.c.bf16 %v302, %v301
  %v352 = vpack.c.bf16 %v304, %v303
  %v353 = vpack.c.bf16 %v306, %v305
  %v354 = vpack.c.bf16 %v308, %v307
  %v355 = vpack.c.bf16 %v310, %v309
  %v356 = vpack.c.bf16 %v312, %v311
  %v357 = vpack.c.bf16 %v314, %v313
  %v358 = vpack.c.bf16 %v316, %v315
  %v359 = vpack.c.bf16 %v318, %v317
  %v360 = vpack.c.bf16 %v320, %v319
  %v361 = vpack.c.bf16 %v322, %v321
  %v362 = vpack.c.bf16 %v324, %v323
  %v363 = vpack.c.bf16 %v326, %v325
  %v364 = vpack.c.bf16 %v328, %v327
  %v365 = vpack.c.bf16 %v330, %v329
  %v366 = vpack.c.bf16 %v332, %v331
  %v367 = vpack.c.bf16 %v334, %v333
  %v368 = vpack.c.bf16 %v336, %v335
  %v369 = vld [vmem:[%s2] sm:$0xf]
  %v370 = vld [vmem:[%s2 + $0x4] sm:$0xf]
  %v371 = vld [vmem:[%s2 + $0x8] sm:$0xf]
  %v372 = vld [vmem:[%s2 + $0xc] sm:$0xf]
  %v373 = vld [vmem:[%s2 + $0x10] sm:$0xf]
  %v374 = vld [vmem:[%s2 + $0x14] sm:$0xf]
  %v375 = vld [vmem:[%s2 + $0x18] sm:$0xf]
  %v376 = vld [vmem:[%s2 + $0x1c] sm:$0xf]
  %v377 = vld [vmem:[%s2 + $0x20] sm:$0xf]
  %v378 = vld [vmem:[%s2 + $0x24] sm:$0xf]
  %v379 = vld [vmem:[%s2 + $0x28] sm:$0xf]
  %v380 = vld [vmem:[%s2 + $0x2c] sm:$0xf]
  %v381 = vld [vmem:[%s2 + $0x30] sm:$0xf]
  %v382 = vld [vmem:[%s2 + $0x34] sm:$0xf]
  %v383 = vld [vmem:[%s2 + $0x38] sm:$0xf]
  %v384 = vld [vmem:[%s2 + $0x3c] sm:$0xf]
  %v401 = vunpack.c.l.b16 %v369
  %v402 = vunpack.c.l.b16 %v370
  %v403 = vunpack.c.l.b16 %v371
  %v404 = vunpack.c.l.b16 %v372
  %v405 = vunpack.c.l.b16 %v373
  %v406 = vunpack.c.l.b16 %v374
  %v407 = vunpack.c.l.b16 %v375
  %v408 = vunpack.c.l.b16 %v376
  %v409 = vunpack.c.l.b16 %v377
  %v410 = vunpack.c.l.b16 %v378
  %v411 = vunpack.c.l.b16 %v379
  %v412 = vunpack.c.l.b16 %v380
  %v413 = vunpack.c.l.b16 %v381
  %v414 = vunpack.c.l.b16 %v382
  %v415 = vunpack.c.l.b16 %v383
  %v416 = vunpack.c.l.b16 %v384
  %v417 = vpack.c.b16 %v402, %v401
  %v418 = vpack.c.b16 %v404, %v403
  %v419 = vpack.c.b16 %v406, %v405
  %v420 = vpack.c.b16 %v408, %v407
  %v421 = vpack.c.b16 %v410, %v409
  %v422 = vpack.c.b16 %v412, %v411
  %v423 = vpack.c.b16 %v414, %v413
  %v424 = vpack.c.b16 %v416, %v415
  %433 = vmatpush.bf16.msra.mxu0 %v424
  %434 = vmatpush.bf16.msra.mxu0 %v423
  %435 = vmatpush.bf16.msra.mxu0 %v422
  %436 = vmatpush.bf16.msra.mxu0 %v421
  %437 = vmatpush.bf16.msra.mxu0 %v420
  %438 = vmatpush.bf16.msra.mxu0 %v419
  %439 = vmatpush.bf16.msra.mxu0 %v418
  %440 = vmatpush.bf16.msra.mxu0 %v417
  %441 = vmatmul.bf16.gmra.mxu0 %v337
  %v442 = vpop.f32.mrf.mxu0
  %v443 = vadd.f32 0.0, %v442
  %v444 = vpop.f32.mrf.mxu0
  %v445 = vadd.f32 0.0, %v444
  %446 = vmatmul.bf16.gmra.mxu0 %v338
  %v447 = vpop.f32.mrf.mxu0
  %v448 = vadd.f32 0.0, %v447
  %v449 = vpop.f32.mrf.mxu0
  %v450 = vadd.f32 0.0, %v449
  %451 = vmatmul.bf16.gmra.mxu0 %v339
  %v452 = vpop.f32.mrf.mxu0
  %v453 = vadd.f32 0.0, %v452
  %v454 = vpop.f32.mrf.mxu0
  %v455 = vadd.f32 0.0, %v454
  %456 = vmatmul.bf16.gmra.mxu0 %v340
  %v457 = vpop.f32.mrf.mxu0
  %v458 = vadd.f32 0.0, %v457
  %v459 = vpop.f32.mrf.mxu0
  %v460 = vadd.f32 0.0, %v459
  %461 = vmatmul.bf16.gmra.mxu0 %v341
  %v462 = vpop.f32.mrf.mxu0
  %v463 = vadd.f32 0.0, %v462
  %v464 = vpop.f32.mrf.mxu0
  %v465 = vadd.f32 0.0, %v464
  %466 = vmatmul.bf16.gmra.mxu0 %v342
  %v467 = vpop.f32.mrf.mxu0
  %v468 = vadd.f32 0.0, %v467
  %v469 = vpop.f32.mrf.mxu0
  %v470 = vadd.f32 0.0, %v469
  %471 = vmatmul.bf16.gmra.mxu0 %v343
  %v472 = vpop.f32.mrf.mxu0
  %v473 = vadd.f32 0.0, %v472
  %v474 = vpop.f32.mrf.mxu0
  %v475 = vadd.f32 0.0, %v474
  %476 = vmatmul.bf16.gmra.mxu0 %v344
  %v477 = vpop.f32.mrf.mxu0
  %v478 = vadd.f32 0.0, %v477
  %v479 = vpop.f32.mrf.mxu0
  %v480 = vadd.f32 0.0, %v479
  %481 = vmatmul.bf16.gmra.mxu0 %v345
  %v482 = vpop.f32.mrf.mxu0
  %v483 = vadd.f32 0.0, %v482
  %v484 = vpop.f32.mrf.mxu0
  %v485 = vadd.f32 0.0, %v484
  %486 = vmatmul.bf16.gmra.mxu0 %v346
  %v487 = vpop.f32.mrf.mxu0
  %v488 = vadd.f32 0.0, %v487
  %v489 = vpop.f32.mrf.mxu0
  %v490 = vadd.f32 0.0, %v489
  %491 = vmatmul.bf16.gmra.mxu0 %v347
  %v492 = vpop.f32.mrf.mxu0
  %v493 = vadd.f32 0.0, %v492
  %v494 = vpop.f32.mrf.mxu0
  %v495 = vadd.f32 0.0, %v494
  %496 = vmatmul.bf16.gmra.mxu0 %v348
  %v497 = vpop.f32.mrf.mxu0
  %v498 = vadd.f32 0.0, %v497
  %v499 = vpop.f32.mrf.mxu0
  %v500 = vadd.f32 0.0, %v499
  %501 = vmatmul.bf16.gmra.mxu0 %v349
  %v502 = vpop.f32.mrf.mxu0
  %v503 = vadd.f32 0.0, %v502
  %v504 = vpop.f32.mrf.mxu0
  %v505 = vadd.f32 0.0, %v504
  %506 = vmatmul.bf16.gmra.mxu0 %v350
  %v507 = vpop.f32.mrf.mxu0
  %v508 = vadd.f32 0.0, %v507
  %v509 = vpop.f32.mrf.mxu0
  %v510 = vadd.f32 0.0, %v509
  %511 = vmatmul.bf16.gmra.mxu0 %v351
  %v512 = vpop.f32.mrf.mxu0
  %v513 = vadd.f32 0.0, %v512
  %v514 = vpop.f32.mrf.mxu0
  %v515 = vadd.f32 0.0, %v514
  %516 = vmatmul.bf16.gmra.mxu0 %v352
  %v517 = vpop.f32.mrf.mxu0
  %v518 = vadd.f32 0.0, %v517
  %v519 = vpop.f32.mrf.mxu0
  %v520 = vadd.f32 0.0, %v519
  %521 = vmatmul.bf16.gmra.mxu0 %v353
  %v522 = vpop.f32.mrf.mxu0
  %v523 = vadd.f32 0.0, %v522
  %v524 = vpop.f32.mrf.mxu0
  %v525 = vadd.f32 0.0, %v524
  %526 = vmatmul.bf16.gmra.mxu0 %v354
  %v527 = vpop.f32.mrf.mxu0
  %v528 = vadd.f32 0.0, %v527
  %v529 = vpop.f32.mrf.mxu0
  %v530 = vadd.f32 0.0, %v529
  %531 = vmatmul.bf16.gmra.mxu0 %v355
  %v532 = vpop.f32.mrf.mxu0
  %v533 = vadd.f32 0.0, %v532
  %v534 = vpop.f32.mrf.mxu0
  %v535 = vadd.f32 0.0, %v534
  %536 = vmatmul.bf16.gmra.mxu0 %v356
  %v537 = vpop.f32.mrf.mxu0
  %v538 = vadd.f32 0.0, %v537
  %v539 = vpop.f32.mrf.mxu0
  %v540 = vadd.f32 0.0, %v539
  %541 = vmatmul.bf16.gmra.mxu0 %v357
  %v542 = vpop.f32.mrf.mxu0
  %v543 = vadd.f32 0.0, %v542
  %v544 = vpop.f32.mrf.mxu0
  %v545 = vadd.f32 0.0, %v544
  %546 = vmatmul.bf16.gmra.mxu0 %v358
  %v547 = vpop.f32.mrf.mxu0
  %v548 = vadd.f32 0.0, %v547
  %v549 = vpop.f32.mrf.mxu0
  %v550 = vadd.f32 0.0, %v549
  %551 = vmatmul.bf16.gmra.mxu0 %v359
  %v552 = vpop.f32.mrf.mxu0
  %v553 = vadd.f32 0.0, %v552
  %v554 = vpop.f32.mrf.mxu0
  %v555 = vadd.f32 0.0, %v554
  %556 = vmatmul.bf16.gmra.mxu0 %v360
  %v557 = vpop.f32.mrf.mxu0
  %v558 = vadd.f32 0.0, %v557
  %v559 = vpop.f32.mrf.mxu0
  %v560 = vadd.f32 0.0, %v559
  %561 = vmatmul.bf16.gmra.mxu0 %v361
  %v562 = vpop.f32.mrf.mxu0
  %v563 = vadd.f32 0.0, %v562
  %v564 = vpop.f32.mrf.mxu0
  %v565 = vadd.f32 0.0, %v564
  %566 = vmatmul.bf16.gmra.mxu0 %v362
  %v567 = vpop.f32.mrf.mxu0
  %v568 = vadd.f32 0.0, %v567
  %v569 = vpop.f32.mrf.mxu0
  %v570 = vadd.f32 0.0, %v569
  %571 = vmatmul.bf16.gmra.mxu0 %v363
  %v572 = vpop.f32.mrf.mxu0
  %v573 = vadd.f32 0.0, %v572
  %v574 = vpop.f32.mrf.mxu0
  %v575 = vadd.f32 0.0, %v574
  %576 = vmatmul.bf16.gmra.mxu0 %v364
  %v577 = vpop.f32.mrf.mxu0
  %v578 = vadd.f32 0.0, %v577
  %v579 = vpop.f32.mrf.mxu0
  %v580 = vadd.f32 0.0, %v579
  %581 = vmatmul.bf16.gmra.mxu0 %v365
  %v582 = vpop.f32.mrf.mxu0
  %v583 = vadd.f32 0.0, %v582
  %v584 = vpop.f32.mrf.mxu0
  %v585 = vadd.f32 0.0, %v584
  %586 = vmatmul.bf16.gmra.mxu0 %v366
  %v587 = vpop.f32.mrf.mxu0
  %v588 = vadd.f32 0.0, %v587
  %v589 = vpop.f32.mrf.mxu0
  %v590 = vadd.f32 0.0, %v589
  %591 = vmatmul.bf16.gmra.mxu0 %v367
  %v592 = vpop.f32.mrf.mxu0
  %v593 = vadd.f32 0.0, %v592
  %v594 = vpop.f32.mrf.mxu0
  %v595 = vadd.f32 0.0, %v594
  %596 = vmatmul.bf16.gmra.mxu0 %v368
  %v597 = vpop.f32.mrf.mxu0
  %v598 = vadd.f32 0.0, %v597
  %v599 = vpop.f32.mrf.mxu0
  %v600 = vadd.f32 0.0, %v599
  %601 = vdwg.mxu0
  %v602 = vmax.f32 %v443, 0.0
  %v603 = vmax.f32 %v445, 0.0
  %v604 = vmax.f32 %v448, 0.0
  %v605 = vmax.f32 %v450, 0.0
  %v606 = vmax.f32 %v453, 0.0
  %v607 = vmax.f32 %v455, 0.0
  %v608 = vmax.f32 %v458, 0.0
  %v609 = vmax.f32 %v460, 0.0
  %v610 = vmax.f32 %v463, 0.0
  %v611 = vmax.f32 %v465, 0.0
  %v612 = vmax.f32 %v468, 0.0
  %v613 = vmax.f32 %v470, 0.0
  %v614 = vmax.f32 %v473, 0.0
  %v615 = vmax.f32 %v475, 0.0
  %v616 = vmax.f32 %v478, 0.0
  %v617 = vmax.f32 %v480, 0.0
  %v618 = vmax.f32 %v483, 0.0
  %v619 = vmax.f32 %v485, 0.0
  %v620 = vmax.f32 %v488, 0.0
  %v621 = vmax.f32 %v490, 0.0
  %v622 = vmax.f32 %v493, 0.0
  %v623 = vmax.f32 %v495, 0.0
  %v624 = vmax.f32 %v498, 0.0
  %v625 = vmax.f32 %v500, 0.0
  %v626 = vmax.f32 %v503, 0.0
  %v627 = vmax.f32 %v505, 0.0
  %v628 = vmax.f32 %v508, 0.0
  %v629 = vmax.f32 %v510, 0.0
  %v630 = vmax.f32 %v513, 0.0
  %v631 = vmax.f32 %v515, 0.0
  %v632 = vmax.f32 %v518, 0.0
  %v633 = vmax.f32 %v520, 0.0
  %v634 = vmax.f32 %v523, 0.0
  %v635 = vmax.f32 %v525, 0.0
  %v636 = vmax.f32 %v528, 0.0
  %v637 = vmax.f32 %v530, 0.0
  %v638 = vmax.f32 %v533, 0.0
  %v639 = vmax.f32 %v535, 0.0
  %v640 = vmax.f32 %v538, 0.0
  %v641 = vmax.f32 %v540, 0.0
  %v642 = vmax.f32 %v543, 0.0
  %v643 = vmax.f32 %v545, 0.0
  %v644 = vmax.f32 %v548, 0.0
  %v645 = vmax.f32 %v550, 0.0
  %v646 = vmax.f32 %v553, 0.0
  %v647 = vmax.f32 %v555, 0.0
  %v648 = vmax.f32 %v558, 0.0
  %v649 = vmax.f32 %v560, 0.0
  %v650 = vmax.f32 %v563, 0.0
  %v651 = vmax.f32 %v565, 0.0
  %v652 = vmax.f32 %v568, 0.0
  %v653 = vmax.f32 %v570, 0.0
  %v654 = vmax.f32 %v573, 0.0
  %v655 = vmax.f32 %v575, 0.0
  %v656 = vmax.f32 %v578, 0.0
  %v657 = vmax.f32 %v580, 0.0
  %v658 = vmax.f32 %v583, 0.0
  %v659 = vmax.f32 %v585, 0.0
  %v660 = vmax.f32 %v588, 0.0
  %v661 = vmax.f32 %v590, 0.0
  %v662 = vmax.f32 %v593, 0.0
  %v663 = vmax.f32 %v595, 0.0
  %v664 = vmax.f32 %v598, 0.0
  %v665 = vmax.f32 %v600, 0.0
  %v666 = vpack.c.bf16 %v603, %v602
  %v667 = vpack.c.bf16 %v605, %v604
  %v668 = vpack.c.bf16 %v607, %v606
  %v669 = vpack.c.bf16 %v609, %v608
  %v670 = vpack.c.bf16 %v611, %v610
  %v671 = vpack.c.bf16 %v613, %v612
  %v672 = vpack.c.bf16 %v615, %v614
  %v673 = vpack.c.bf16 %v617, %v616
  %v674 = vpack.c.bf16 %v619, %v618
  %v675 = vpack.c.bf16 %v621, %v620
  %v676 = vpack.c.bf16 %v623, %v622
  %v677 = vpack.c.bf16 %v625, %v624
  %v678 = vpack.c.bf16 %v627, %v626
  %v679 = vpack.c.bf16 %v629, %v628
  %v680 = vpack.c.bf16 %v631, %v630
  %v681 = vpack.c.bf16 %v633, %v632
  %v682 = vpack.c.bf16 %v635, %v634
  %v683 = vpack.c.bf16 %v637, %v636
  %v684 = vpack.c.bf16 %v639, %v638
  %v685 = vpack.c.bf16 %v641, %v640
  %v686 = vpack.c.bf16 %v643, %v642
  %v687 = vpack.c.bf16 %v645, %v644
  %v688 = vpack.c.bf16 %v647, %v646
  %v689 = vpack.c.bf16 %v649, %v648
  %v690 = vpack.c.bf16 %v651, %v650
  %v691 = vpack.c.bf16 %v653, %v652
  %v692 = vpack.c.bf16 %v655, %v654
  %v693 = vpack.c.bf16 %v657, %v656
  %v694 = vpack.c.bf16 %v659, %v658
  %v695 = vpack.c.bf16 %v661, %v660
  %v696 = vpack.c.bf16 %v663, %v662
  %v697 = vpack.c.bf16 %v665, %v664
  %v698 = vld [vmem:[%s3] sm:$0xf]
  %v699 = vld [vmem:[%s3 + $0x4] sm:$0xf]
  %v700 = vld [vmem:[%s3 + $0x8] sm:$0xf]
  %v701 = vld [vmem:[%s3 + $0xc] sm:$0xf]
  %v702 = vld [vmem:[%s3 + $0x10] sm:$0xf]
  %v703 = vld [vmem:[%s3 + $0x14] sm:$0xf]
  %v704 = vld [vmem:[%s3 + $0x18] sm:$0xf]
  %v705 = vld [vmem:[%s3 + $0x1c] sm:$0xf]
  %v706 = vld [vmem:[%s3 + $0x20] sm:$0xf]
  %v707 = vld [vmem:[%s3 + $0x24] sm:$0xf]
  %v708 = vld [vmem:[%s3 + $0x28] sm:$0xf]
  %v709 = vld [vmem:[%s3 + $0x2c] sm:$0xf]
  %v710 = vld [vmem:[%s3 + $0x30] sm:$0xf]
  %v711 = vld [vmem:[%s3 + $0x34] sm:$0xf]
  %v712 = vld [vmem:[%s3 + $0x38] sm:$0xf]
  %v713 = vld [vmem:[%s3 + $0x3c] sm:$0xf]
  %v730 = vunpack.c.l.b16 %v698
  %v731 = vunpack.c.l.b16 %v699
  %v732 = vunpack.c.l.b16 %v700
  %v733 = vunpack.c.l.b16 %v701
  %v734 = vunpack.c.l.b16 %v702
  %v735 = vunpack.c.l.b16 %v703
  %v736 = vunpack.c.l.b16 %v704
  %v737 = vunpack.c.l.b16 %v705
  %v738 = vunpack.c.l.b16 %v706
  %v739 = vunpack.c.l.b16 %v707
  %v740 = vunpack.c.l.b16 %v708
  %v741 = vunpack.c.l.b16 %v709
  %v742 = vunpack.c.l.b16 %v710
  %v743 = vunpack.c.l.b16 %v711
  %v744 = vunpack.c.l.b16 %v712
  %v745 = vunpack.c.l.b16 %v713
  %v746 = vpack.c.b16 %v731, %v730
  %v747 = vpack.c.b16 %v733, %v732
  %v748 = vpack.c.b16 %v735, %v734
  %v749 = vpack.c.b16 %v737, %v736
  %v750 = vpack.c.b16 %v739, %v738
  %v751 = vpack.c.b16 %v741, %v740
  %v752 = vpack.c.b16 %v743, %v742
  %v753 = vpack.c.b16 %v745, %v744
  %762 = vmatpush.bf16.msra.mxu0 %v753
  %763 = vmatpush.bf16.msra.mxu0 %v752
  %764 = vmatpush.bf16.msra.mxu0 %v751
  %765 = vmatpush.bf16.msra.mxu0 %v750
  %766 = vmatpush.bf16.msra.mxu0 %v749
  %767 = vmatpush.bf16.msra.mxu0 %v748
  %768 = vmatpush.bf16.msra.mxu0 %v747
  %769 = vmatpush.bf16.msra.mxu0 %v746
  %770 = vmatmul.bf16.gmra.mxu0 %v666
  %v771 = vpop.f32.mrf.mxu0
  %v772 = vadd.f32 0.0, %v771
  %v773 = vpop.f32.mrf.mxu0
  %v774 = vadd.f32 0.0, %v773
  %775 = vmatmul.bf16.gmra.mxu0 %v667
  %v776 = vpop.f32.mrf.mxu0
  %v777 = vadd.f32 0.0, %v776
  %v778 = vpop.f32.mrf.mxu0
  %v779 = vadd.f32 0.0, %v778
  %780 = vmatmul.bf16.gmra.mxu0 %v668
  %v781 = vpop.f32.mrf.mxu0
  %v782 = vadd.f32 0.0, %v781
  %v783 = vpop.f32.mrf.mxu0
  %v784 = vadd.f32 0.0, %v783
  %785 = vmatmul.bf16.gmra.mxu0 %v669
  %v786 = vpop.f32.mrf.mxu0
  %v787 = vadd.f32 0.0, %v786
  %v788 = vpop.f32.mrf.mxu0
  %v789 = vadd.f32 0.0, %v788
  %790 = vmatmul.bf16.gmra.mxu0 %v670
  %v791 = vpop.f32.mrf.mxu0
  %v792 = vadd.f32 0.0, %v791
  %v793 = vpop.f32.mrf.mxu0
  %v794 = vadd.f32 0.0, %v793
  %795 = vmatmul.bf16.gmra.mxu0 %v671
  %v796 = vpop.f32.mrf.mxu0
  %v797 = vadd.f32 0.0, %v796
  %v798 = vpop.f32.mrf.mxu0
  %v799 = vadd.f32 0.0, %v798
  %800 = vmatmul.bf16.gmra.mxu0 %v672
  %v801 = vpop.f32.mrf.mxu0
  %v802 = vadd.f32 0.0, %v801
  %v803 = vpop.f32.mrf.mxu0
  %v804 = vadd.f32 0.0, %v803
  %805 = vmatmul.bf16.gmra.mxu0 %v673
  %v806 = vpop.f32.mrf.mxu0
  %v807 = vadd.f32 0.0, %v806
  %v808 = vpop.f32.mrf.mxu0
  %v809 = vadd.f32 0.0, %v808
  %810 = vmatmul.bf16.gmra.mxu0 %v674
  %v811 = vpop.f32.mrf.mxu0
  %v812 = vadd.f32 0.0, %v811
  %v813 = vpop.f32.mrf.mxu0
  %v814 = vadd.f32 0.0, %v813
  %815 = vmatmul.bf16.gmra.mxu0 %v675
  %v816 = vpop.f32.mrf.mxu0
  %v817 = vadd.f32 0.0, %v816
  %v818 = vpop.f32.mrf.mxu0
  %v819 = vadd.f32 0.0, %v818
  %820 = vmatmul.bf16.gmra.mxu0 %v676
  %v821 = vpop.f32.mrf.mxu0
  %v822 = vadd.f32 0.0, %v821
  %v823 = vpop.f32.mrf.mxu0
  %v824 = vadd.f32 0.0, %v823
  %825 = vmatmul.bf16.gmra.mxu0 %v677
  %v826 = vpop.f32.mrf.mxu0
  %v827 = vadd.f32 0.0, %v826
  %v828 = vpop.f32.mrf.mxu0
  %v829 = vadd.f32 0.0, %v828
  %830 = vmatmul.bf16.gmra.mxu0 %v678
  %v831 = vpop.f32.mrf.mxu0
  %v832 = vadd.f32 0.0, %v831
  %v833 = vpop.f32.mrf.mxu0
  %v834 = vadd.f32 0.0, %v833
  %835 = vmatmul.bf16.gmra.mxu0 %v679
  %v836 = vpop.f32.mrf.mxu0
  %v837 = vadd.f32 0.0, %v836
  %v838 = vpop.f32.mrf.mxu0
  %v839 = vadd.f32 0.0, %v838
  %840 = vmatmul.bf16.gmra.mxu0 %v680
  %v841 = vpop.f32.mrf.mxu0
  %v842 = vadd.f32 0.0, %v841
  %v843 = vpop.f32.mrf.mxu0
  %v844 = vadd.f32 0.0, %v843
  %845 = vmatmul.bf16.gmra.mxu0 %v681
  %v846 = vpop.f32.mrf.mxu0
  %v847 = vadd.f32 0.0, %v846
  %v848 = vpop.f32.mrf.mxu0
  %v849 = vadd.f32 0.0, %v848
  %850 = vmatmul.bf16.gmra.mxu0 %v682
  %v851 = vpop.f32.mrf.mxu0
  %v852 = vadd.f32 0.0, %v851
  %v853 = vpop.f32.mrf.mxu0
  %v854 = vadd.f32 0.0, %v853
  %855 = vmatmul.bf16.gmra.mxu0 %v683
  %v856 = vpop.f32.mrf.mxu0
  %v857 = vadd.f32 0.0, %v856
  %v858 = vpop.f32.mrf.mxu0
  %v859 = vadd.f32 0.0, %v858
  %860 = vmatmul.bf16.gmra.mxu0 %v684
  %v861 = vpop.f32.mrf.mxu0
  %v862 = vadd.f32 0.0, %v861
  %v863 = vpop.f32.mrf.mxu0
  %v864 = vadd.f32 0.0, %v863
  %865 = vmatmul.bf16.gmra.mxu0 %v685
  %v866 = vpop.f32.mrf.mxu0
  %v867 = vadd.f32 0.0, %v866
  %v868 = vpop.f32.mrf.mxu0
  %v869 = vadd.f32 0.0, %v868
  %870 = vmatmul.bf16.gmra.mxu0 %v686
  %v871 = vpop.f32.mrf.mxu0
  %v872 = vadd.f32 0.0, %v871
  %v873 = vpop.f32.mrf.mxu0
  %v874 = vadd.f32 0.0, %v873
  %875 = vmatmul.bf16.gmra.mxu0 %v687
  %v876 = vpop.f32.mrf.mxu0
  %v877 = vadd.f32 0.0, %v876
  %v878 = vpop.f32.mrf.mxu0
  %v879 = vadd.f32 0.0, %v878
  %880 = vmatmul.bf16.gmra.mxu0 %v688
  %v881 = vpop.f32.mrf.mxu0
  %v882 = vadd.f32 0.0, %v881
  %v883 = vpop.f32.mrf.mxu0
  %v884 = vadd.f32 0.0, %v883
  %885 = vmatmul.bf16.gmra.mxu0 %v689
  %v886 = vpop.f32.mrf.mxu0
  %v887 = vadd.f32 0.0, %v886
  %v888 = vpop.f32.mrf.mxu0
  %v889 = vadd.f32 0.0, %v888
  %890 = vmatmul.bf16.gmra.mxu0 %v690
  %v891 = vpop.f32.mrf.mxu0
  %v892 = vadd.f32 0.0, %v891
  %v893 = vpop.f32.mrf.mxu0
  %v894 = vadd.f32 0.0, %v893
  %895 = vmatmul.bf16.gmra.mxu0 %v691
  %v896 = vpop.f32.mrf.mxu0
  %v897 = vadd.f32 0.0, %v896
  %v898 = vpop.f32.mrf.mxu0
  %v899 = vadd.f32 0.0, %v898
  %900 = vmatmul.bf16.gmra.mxu0 %v692
  %v901 = vpop.f32.mrf.mxu0
  %v902 = vadd.f32 0.0, %v901
  %v903 = vpop.f32.mrf.mxu0
  %v904 = vadd.f32 0.0, %v903
  %905 = vmatmul.bf16.gmra.mxu0 %v693
  %v906 = vpop.f32.mrf.mxu0
  %v907 = vadd.f32 0.0, %v906
  %v908 = vpop.f32.mrf.mxu0
  %v909 = vadd.f32 0.0, %v908
  %910 = vmatmul.bf16.gmra.mxu0 %v694
  %v911 = vpop.f32.mrf.mxu0
  %v912 = vadd.f32 0.0, %v911
  %v913 = vpop.f32.mrf.mxu0
  %v914 = vadd.f32 0.0, %v913
  %915 = vmatmul.bf16.gmra.mxu0 %v695
  %v916 = vpop.f32.mrf.mxu0
  %v917 = vadd.f32 0.0, %v916
  %v918 = vpop.f32.mrf.mxu0
  %v919 = vadd.f32 0.0, %v918
  %920 = vmatmul.bf16.gmra.mxu0 %v696
  %v921 = vpop.f32.mrf.mxu0
  %v922 = vadd.f32 0.0, %v921
  %v923 = vpop.f32.mrf.mxu0
  %v924 = vadd.f32 0.0, %v923
  %925 = vmatmul.bf16.gmra.mxu0 %v697
  %v926 = vpop.f32.mrf.mxu0
  %v927 = vadd.f32 0.0, %v926
  %v928 = vpop.f32.mrf.mxu0
  %v929 = vadd.f32 0.0, %v928
  %930 = vdwg.mxu0
  %995 = vrot.lane.b32.xlu0 %v772, 16
  %v996 = vpop.permute.xlu0 %995
  %997 = vrot.lane.b32.xlu0 %v774, 16
  %v998 = vpop.permute.xlu0 %997
  %999 = vrot.lane.b32.xlu0 %v777, 16
  %v1000 = vpop.permute.xlu0 %999
  %1001 = vrot.lane.b32.xlu0 %v779, 16
  %v1002 = vpop.permute.xlu0 %1001
  %1003 = vrot.lane.b32.xlu0 %v782, 16
  %v1004 = vpop.permute.xlu0 %1003
  %1005 = vrot.lane.b32.xlu0 %v784, 16
  %v1006 = vpop.permute.xlu0 %1005
  %1007 = vrot.lane.b32.xlu0 %v787, 16
  %v1008 = vpop.permute.xlu0 %1007
  %1009 = vrot.lane.b32.xlu0 %v789, 16
  %v1010 = vpop.permute.xlu0 %1009
  %1011 = vrot.lane.b32.xlu0 %v792, 16
  %v1012 = vpop.permute.xlu0 %1011
  %1013 = vrot.lane.b32.xlu0 %v794, 16
  %v1014 = vpop.permute.xlu0 %1013
  %1015 = vrot.lane.b32.xlu0 %v797, 16
  %v1016 = vpop.permute.xlu0 %1015
  %1017 = vrot.lane.b32.xlu0 %v799, 16
  %v1018 = vpop.permute.xlu0 %1017
  %1019 = vrot.lane.b32.xlu0 %v802, 16
  %v1020 = vpop.permute.xlu0 %1019
  %1021 = vrot.lane.b32.xlu0 %v804, 16
  %v1022 = vpop.permute.xlu0 %1021
  %1023 = vrot.lane.b32.xlu0 %v807, 16
  %v1024 = vpop.permute.xlu0 %1023
  %1025 = vrot.lane.b32.xlu0 %v809, 16
  %v1026 = vpop.permute.xlu0 %1025
  %1027 = vrot.lane.b32.xlu0 %v812, 16
  %v1028 = vpop.permute.xlu0 %1027
  %1029 = vrot.lane.b32.xlu0 %v814, 16
  %v1030 = vpop.permute.xlu0 %1029
  %1031 = vrot.lane.b32.xlu0 %v817, 16
  %v1032 = vpop.permute.xlu0 %1031
  %1033 = vrot.lane.b32.xlu0 %v819, 16
  %v1034 = vpop.permute.xlu0 %1033
  %1035 = vrot.lane.b32.xlu0 %v822, 16
  %v1036 = vpop.permute.xlu0 %1035
  %1037 = vrot.lane.b32.xlu0 %v824, 16
  %v1038 = vpop.permute.xlu0 %1037
  %1039 = vrot.lane.b32.xlu0 %v827, 16
  %v1040 = vpop.permute.xlu0 %1039
  %1041 = vrot.lane.b32.xlu0 %v829, 16
  %v1042 = vpop.permute.xlu0 %1041
  %1043 = vrot.lane.b32.xlu0 %v832, 16
  %v1044 = vpop.permute.xlu0 %1043
  %1045 = vrot.lane.b32.xlu0 %v834, 16
  %v1046 = vpop.permute.xlu0 %1045
  %1047 = vrot.lane.b32.xlu0 %v837, 16
  %v1048 = vpop.permute.xlu0 %1047
  %1049 = vrot.lane.b32.xlu0 %v839, 16
  %v1050 = vpop.permute.xlu0 %1049
  %1051 = vrot.lane.b32.xlu0 %v842, 16
  %v1052 = vpop.permute.xlu0 %1051
  %1053 = vrot.lane.b32.xlu0 %v844, 16
  %v1054 = vpop.permute.xlu0 %1053
  %1055 = vrot.lane.b32.xlu0 %v847, 16
  %v1056 = vpop.permute.xlu0 %1055
  %1057 = vrot.lane.b32.xlu0 %v849, 16
  %v1058 = vpop.permute.xlu0 %1057
  %1059 = vrot.lane.b32.xlu0 %v852, 16
  %v1060 = vpop.permute.xlu0 %1059
  %1061 = vrot.lane.b32.xlu0 %v854, 16
  %v1062 = vpop.permute.xlu0 %1061
  %1063 = vrot.lane.b32.xlu0 %v857, 16
  %v1064 = vpop.permute.xlu0 %1063
  %1065 = vrot.lane.b32.xlu0 %v859, 16
  %v1066 = vpop.permute.xlu0 %1065
  %1067 = vrot.lane.b32.xlu0 %v862, 16
  %v1068 = vpop.permute.xlu0 %1067
  %1069 = vrot.lane.b32.xlu0 %v864, 16
  %v1070 = vpop.permute.xlu0 %1069
  %1071 = vrot.lane.b32.xlu0 %v867, 16
  %v1072 = vpop.permute.xlu0 %1071
  %1073 = vrot.lane.b32.xlu0 %v869, 16
  %v1074 = vpop.permute.xlu0 %1073
  %1075 = vrot.lane.b32.xlu0 %v872, 16
  %v1076 = vpop.permute.xlu0 %1075
  %1077 = vrot.lane.b32.xlu0 %v874, 16
  %v1078 = vpop.permute.xlu0 %1077
  %1079 = vrot.lane.b32.xlu0 %v877, 16
  %v1080 = vpop.permute.xlu0 %1079
  %1081 = vrot.lane.b32.xlu0 %v879, 16
  %v1082 = vpop.permute.xlu0 %1081
  %1083 = vrot.lane.b32.xlu0 %v882, 16
  %v1084 = vpop.permute.xlu0 %1083
  %1085 = vrot.lane.b32.xlu0 %v884, 16
  %v1086 = vpop.permute.xlu0 %1085
  %1087 = vrot.lane.b32.xlu0 %v887, 16
  %v1088 = vpop.permute.xlu0 %1087
  %1089 = vrot.lane.b32.xlu0 %v889, 16
  %v1090 = vpop.permute.xlu0 %1089
  %1091 = vrot.lane.b32.xlu0 %v892, 16
  %v1092 = vpop.permute.xlu0 %1091
  %1093 = vrot.lane.b32.xlu0 %v894, 16
  %v1094 = vpop.permute.xlu0 %1093
  %1095 = vrot.lane.b32.xlu0 %v897, 16
  %v1096 = vpop.permute.xlu0 %1095
  %1097 = vrot.lane.b32.xlu0 %v899, 16
  %v1098 = vpop.permute.xlu0 %1097
  %1099 = vrot.lane.b32.xlu0 %v902, 16
  %v1100 = vpop.permute.xlu0 %1099
  %1101 = vrot.lane.b32.xlu0 %v904, 16
  %v1102 = vpop.permute.xlu0 %1101
  %1103 = vrot.lane.b32.xlu0 %v907, 16
  %v1104 = vpop.permute.xlu0 %1103
  %1105 = vrot.lane.b32.xlu0 %v909, 16
  %v1106 = vpop.permute.xlu0 %1105
  %1107 = vrot.lane.b32.xlu0 %v912, 16
  %v1108 = vpop.permute.xlu0 %1107
  %1109 = vrot.lane.b32.xlu0 %v914, 16
  %v1110 = vpop.permute.xlu0 %1109
  %1111 = vrot.lane.b32.xlu0 %v917, 16
  %v1112 = vpop.permute.xlu0 %1111
  %1113 = vrot.lane.b32.xlu0 %v919, 16
  %v1114 = vpop.permute.xlu0 %1113
  %1115 = vrot.lane.b32.xlu0 %v922, 16
  %v1116 = vpop.permute.xlu0 %1115
  %1117 = vrot.lane.b32.xlu0 %v924, 16
  %v1118 = vpop.permute.xlu0 %1117
  %1119 = vrot.lane.b32.xlu0 %v927, 16
  %v1120 = vpop.permute.xlu0 %1119
  %1121 = vrot.lane.b32.xlu0 %v929, 16
  %v1122 = vpop.permute.xlu0 %1121
  %v1187 = vsub.f32 %v81, %v996
  %v1188 = vsub.f32 %v82, %v998
  %v1189 = vsub.f32 %v83, %v1000
  %v1190 = vsub.f32 %v84, %v1002
  %v1191 = vsub.f32 %v85, %v1004
  %v1192 = vsub.f32 %v86, %v1006
  %v1193 = vsub.f32 %v87, %v1008
  %v1194 = vsub.f32 %v88, %v1010
  %v1195 = vsub.f32 %v89, %v1012
  %v1196 = vsub.f32 %v90, %v1014
  %v1197 = vsub.f32 %v91, %v1016
  %v1198 = vsub.f32 %v92, %v1018
  %v1199 = vsub.f32 %v93, %v1020
  %v1200 = vsub.f32 %v94, %v1022
  %v1201 = vsub.f32 %v95, %v1024
  %v1202 = vsub.f32 %v96, %v1026
  %v1203 = vsub.f32 %v97, %v1028
  %v1204 = vsub.f32 %v98, %v1030
  %v1205 = vsub.f32 %v99, %v1032
  %v1206 = vsub.f32 %v100, %v1034
  %v1207 = vsub.f32 %v101, %v1036
  %v1208 = vsub.f32 %v102, %v1038
  %v1209 = vsub.f32 %v103, %v1040
  %v1210 = vsub.f32 %v104, %v1042
  %v1211 = vsub.f32 %v105, %v1044
  %v1212 = vsub.f32 %v106, %v1046
  %v1213 = vsub.f32 %v107, %v1048
  %v1214 = vsub.f32 %v108, %v1050
  %v1215 = vsub.f32 %v109, %v1052
  %v1216 = vsub.f32 %v110, %v1054
  %v1217 = vsub.f32 %v111, %v1056
  %v1218 = vsub.f32 %v112, %v1058
  %v1219 = vsub.f32 %v113, %v1060
  %v1220 = vsub.f32 %v114, %v1062
  %v1221 = vsub.f32 %v115, %v1064
  %v1222 = vsub.f32 %v116, %v1066
  %v1223 = vsub.f32 %v117, %v1068
  %v1224 = vsub.f32 %v118, %v1070
  %v1225 = vsub.f32 %v119, %v1072
  %v1226 = vsub.f32 %v120, %v1074
  %v1227 = vsub.f32 %v121, %v1076
  %v1228 = vsub.f32 %v122, %v1078
  %v1229 = vsub.f32 %v123, %v1080
  %v1230 = vsub.f32 %v124, %v1082
  %v1231 = vsub.f32 %v125, %v1084
  %v1232 = vsub.f32 %v126, %v1086
  %v1233 = vsub.f32 %v127, %v1088
  %v1234 = vsub.f32 %v128, %v1090
  %v1235 = vsub.f32 %v129, %v1092
  %v1236 = vsub.f32 %v130, %v1094
  %v1237 = vsub.f32 %v131, %v1096
  %v1238 = vsub.f32 %v132, %v1098
  %v1239 = vsub.f32 %v133, %v1100
  %v1240 = vsub.f32 %v134, %v1102
  %v1241 = vsub.f32 %v135, %v1104
  %v1242 = vsub.f32 %v136, %v1106
  %v1243 = vsub.f32 %v137, %v1108
  %v1244 = vsub.f32 %v138, %v1110
  %v1245 = vsub.f32 %v139, %v1112
  %v1246 = vsub.f32 %v140, %v1114
  %v1247 = vsub.f32 %v141, %v1116
  %v1248 = vsub.f32 %v142, %v1118
  %v1249 = vsub.f32 %v143, %v1120
  %v1250 = vsub.f32 %v144, %v1122
  %v1251 = vmul.f32 %v1187, %v1187
  %v1252 = vmul.f32 %v1188, %v1188
  %v1253 = vmul.f32 %v1189, %v1189
  %v1254 = vmul.f32 %v1190, %v1190
  %v1255 = vmul.f32 %v1191, %v1191
  %v1256 = vmul.f32 %v1192, %v1192
  %v1257 = vmul.f32 %v1193, %v1193
  %v1258 = vmul.f32 %v1194, %v1194
  %v1259 = vmul.f32 %v1195, %v1195
  %v1260 = vmul.f32 %v1196, %v1196
  %v1261 = vmul.f32 %v1197, %v1197
  %v1262 = vmul.f32 %v1198, %v1198
  %v1263 = vmul.f32 %v1199, %v1199
  %v1264 = vmul.f32 %v1200, %v1200
  %v1265 = vmul.f32 %v1201, %v1201
  %v1266 = vmul.f32 %v1202, %v1202
  %v1267 = vmul.f32 %v1203, %v1203
  %v1268 = vmul.f32 %v1204, %v1204
  %v1269 = vmul.f32 %v1205, %v1205
  %v1270 = vmul.f32 %v1206, %v1206
  %v1271 = vmul.f32 %v1207, %v1207
  %v1272 = vmul.f32 %v1208, %v1208
  %v1273 = vmul.f32 %v1209, %v1209
  %v1274 = vmul.f32 %v1210, %v1210
  %v1275 = vmul.f32 %v1211, %v1211
  %v1276 = vmul.f32 %v1212, %v1212
  %v1277 = vmul.f32 %v1213, %v1213
  %v1278 = vmul.f32 %v1214, %v1214
  %v1279 = vmul.f32 %v1215, %v1215
  %v1280 = vmul.f32 %v1216, %v1216
  %v1281 = vmul.f32 %v1217, %v1217
  %v1282 = vmul.f32 %v1218, %v1218
  %v1283 = vmul.f32 %v1219, %v1219
  %v1284 = vmul.f32 %v1220, %v1220
  %v1285 = vmul.f32 %v1221, %v1221
  %v1286 = vmul.f32 %v1222, %v1222
  %v1287 = vmul.f32 %v1223, %v1223
  %v1288 = vmul.f32 %v1224, %v1224
  %v1289 = vmul.f32 %v1225, %v1225
  %v1290 = vmul.f32 %v1226, %v1226
  %v1291 = vmul.f32 %v1227, %v1227
  %v1292 = vmul.f32 %v1228, %v1228
  %v1293 = vmul.f32 %v1229, %v1229
  %v1294 = vmul.f32 %v1230, %v1230
  %v1295 = vmul.f32 %v1231, %v1231
  %v1296 = vmul.f32 %v1232, %v1232
  %v1297 = vmul.f32 %v1233, %v1233
  %v1298 = vmul.f32 %v1234, %v1234
  %v1299 = vmul.f32 %v1235, %v1235
  %v1300 = vmul.f32 %v1236, %v1236
  %v1301 = vmul.f32 %v1237, %v1237
  %v1302 = vmul.f32 %v1238, %v1238
  %v1303 = vmul.f32 %v1239, %v1239
  %v1304 = vmul.f32 %v1240, %v1240
  %v1305 = vmul.f32 %v1241, %v1241
  %v1306 = vmul.f32 %v1242, %v1242
  %v1307 = vmul.f32 %v1243, %v1243
  %v1308 = vmul.f32 %v1244, %v1244
  %v1309 = vmul.f32 %v1245, %v1245
  %v1310 = vmul.f32 %v1246, %v1246
  %v1311 = vmul.f32 %v1247, %v1247
  %v1312 = vmul.f32 %v1248, %v1248
  %v1313 = vmul.f32 %v1249, %v1249
  %v1314 = vmul.f32 %v1250, %v1250
  %v1315 = vadd.f32 %v1251, %v1283
  %v1316 = vadd.f32 %v1252, %v1284
  %v1317 = vadd.f32 %v1253, %v1285
  %v1318 = vadd.f32 %v1254, %v1286
  %v1319 = vadd.f32 %v1255, %v1287
  %v1320 = vadd.f32 %v1256, %v1288
  %v1321 = vadd.f32 %v1257, %v1289
  %v1322 = vadd.f32 %v1258, %v1290
  %v1323 = vadd.f32 %v1259, %v1291
  %v1324 = vadd.f32 %v1260, %v1292
  %v1325 = vadd.f32 %v1261, %v1293
  %v1326 = vadd.f32 %v1262, %v1294
  %v1327 = vadd.f32 %v1263, %v1295
  %v1328 = vadd.f32 %v1264, %v1296
  %v1329 = vadd.f32 %v1265, %v1297
  %v1330 = vadd.f32 %v1266, %v1298
  %v1331 = vadd.f32 %v1267, %v1299
  %v1332 = vadd.f32 %v1268, %v1300
  %v1333 = vadd.f32 %v1269, %v1301
  %v1334 = vadd.f32 %v1270, %v1302
  %v1335 = vadd.f32 %v1271, %v1303
  %v1336 = vadd.f32 %v1272, %v1304
  %v1337 = vadd.f32 %v1273, %v1305
  %v1338 = vadd.f32 %v1274, %v1306
  %v1339 = vadd.f32 %v1275, %v1307
  %v1340 = vadd.f32 %v1276, %v1308
  %v1341 = vadd.f32 %v1277, %v1309
  %v1342 = vadd.f32 %v1278, %v1310
  %v1343 = vadd.f32 %v1279, %v1311
  %v1344 = vadd.f32 %v1280, %v1312
  %v1345 = vadd.f32 %v1281, %v1313
  %v1346 = vadd.f32 %v1282, %v1314
  %v1347 = vadd.f32 %v1315, %v1331
  %v1348 = vadd.f32 %v1316, %v1332
  %v1349 = vadd.f32 %v1317, %v1333
  %v1350 = vadd.f32 %v1318, %v1334
  %v1351 = vadd.f32 %v1319, %v1335
  %v1352 = vadd.f32 %v1320, %v1336
  %v1353 = vadd.f32 %v1321, %v1337
  %v1354 = vadd.f32 %v1322, %v1338
  %v1355 = vadd.f32 %v1323, %v1339
  %v1356 = vadd.f32 %v1324, %v1340
  %v1357 = vadd.f32 %v1325, %v1341
  %v1358 = vadd.f32 %v1326, %v1342
  %v1359 = vadd.f32 %v1327, %v1343
  %v1360 = vadd.f32 %v1328, %v1344
  %v1361 = vadd.f32 %v1329, %v1345
  %v1362 = vadd.f32 %v1330, %v1346
  %v1363 = vadd.f32 %v1347, %v1355
  %v1364 = vadd.f32 %v1348, %v1356
  %v1365 = vadd.f32 %v1349, %v1357
  %v1366 = vadd.f32 %v1350, %v1358
  %v1367 = vadd.f32 %v1351, %v1359
  %v1368 = vadd.f32 %v1352, %v1360
  %v1369 = vadd.f32 %v1353, %v1361
  %v1370 = vadd.f32 %v1354, %v1362
  %v1371 = vadd.f32 %v1363, %v1367
  %v1372 = vadd.f32 %v1364, %v1368
  %v1373 = vadd.f32 %v1365, %v1369
  %v1374 = vadd.f32 %v1366, %v1370
  %v1375 = vadd.f32 %v1371, %v1373
  %v1376 = vadd.f32 %v1372, %v1374
  %v1377 = vadd.f32 %v1375, %v1376
  %1379 = vrot.lane.b32.xlu0 %v1377, 112
  %v1380 = vpop.permute.xlu0 %1379
  %vm1382 = vcmask 130048
  %1383 = vst.msk [vmem:[%s4] sm:$0xff] %vm1382, %v1380
  // Predicated region
  $region18: #{ddpm_loss_pallas.1} parent=0 // pred_check
    _
  $region19: #{ddpm_loss_pallas.1} parent=0 // pred_check_branch
    %1385 = sbr.rel (0) target = $region21
  $region20: #{ddpm_loss_pallas.1} parent=0 // pred_region
    _
  $region21: #{ddpm_loss_pallas.1} parent=0 // pred_fallthru
    _
  // Predicated region
  $region22: #{ddpm_loss_pallas.1} parent=0 // pred_check
    _
  $region23: #{ddpm_loss_pallas.1} parent=0 // pred_check_branch
    %1387 = sbr.rel (0) target = $region25
  $region24: #{ddpm_loss_pallas.1} parent=0 // pred_region
    _
  $region25: #{ddpm_loss_pallas.1} parent=0 // pred_fallthru
    _

</llo_original>
